<compile_context>
chip_gen: v7x
topology: tpu7x:2x2x1
jax: 0.10.0
libtpu: 0.0.40
codegen_flags: <defaults>
</compile_context>

<pallas_src>
import math

import jax
import jax.numpy as jnp
from jax.experimental import pallas as pl
from jax.experimental.pallas import tpu as pltpu


def _round_up(value, multiple):
    return (value + multiple - 1) // multiple * multiple


def _discriminator_kernel(x_ref, s_ref, w_ref, o_ref):
    # h = summary @ W on the MXU; operands in native dtype, f32 accumulation.
    h = jnp.dot(s_ref[...], w_ref[...], preferred_element_type=jnp.float32)
    # Elementwise product + hidden-dim reduce in f32 (VPU + XLU).
    prod = x_ref[...].astype(jnp.float32) * h
    o_ref[...] = jnp.sum(prod, axis=1, keepdims=True).astype(o_ref.dtype)


def _pick_row_tile(n, h, in_itemsize, w_itemsize, in_buffers, vmem_budget_bytes):
    """Pick the row tile and tile count; returns (tile_rows, num_tiles, vmem_need)."""
    # Sublane granule: 8 rows for 4-byte, 16 for 2-byte, 32 for 1-byte dtypes.
    sublane = max(8, 32 // max(in_itemsize, 1))
    h_lanes = _round_up(h, 128)                       # lane padding of the hidden dim
    w_sublane = max(8, 32 // max(w_itemsize, 1))
    # Weight block (grid-invariant, but conservatively count 2 buffers).
    weight_bytes = 2 * _round_up(h, w_sublane) * h_lanes * w_itemsize

    def tile_bytes(rows):
        inp = in_buffers * 2 * rows * h_lanes * in_itemsize   # x + summary blocks
        out = 2 * rows * 128 * 4                              # (rows, 1) f32 pads to 128 lanes
        tmp = 2 * rows * h_lanes * 4                          # in-kernel f32 h and prod temps
        return inp + out + tmp

    tile_rows = sublane
    for cand in (8192, 4096, 2048, 1024, 512, 256, 128, 64, 32, 16, 8):
        if cand % sublane:
            continue
        if weight_bytes + tile_bytes(cand) <= vmem_budget_bytes:
            tile_rows = cand
            break

    # Small inputs: a single tile, just round rows up to the sublane granule.
    if _round_up(n, sublane) <= tile_rows:
        tile_rows = _round_up(n, sublane)

    num_tiles = pl.cdiv(n, tile_rows)

    # Megacore balance (v7x): a single huge tile wastes one TensorCore when N
    # is large enough that two halves still amortize the per-step overhead.
    if num_tiles == 1 and n >= 4096:
        tile_rows = _round_up(pl.cdiv(n, 2), sublane)
        num_tiles = pl.cdiv(n, tile_rows)

    # Megacore balance (v7x): avoid small odd tile counts (e.g. 3 -> 2+1 split).
    if 1 < num_tiles < 8 and num_tiles % 2 == 1:
        balanced = _round_up(pl.cdiv(n, num_tiles + 1), sublane)
        if balanced >= sublane and pl.cdiv(n, balanced) % 2 == 0:
            tile_rows = balanced
            num_tiles = pl.cdiv(n, balanced)

    vmem_need = weight_bytes + tile_bytes(tile_rows)
    return tile_rows, num_tiles, vmem_need


def _input_spec(tile_rows, h, depth):
    """Row-block spec; asks for deeper buffering when the API supports it."""
    index_map = lambda i: (i, 0)
    if depth > 2 and hasattr(pl, "Buffered"):
        try:
            return pl.BlockSpec(
                (tile_rows, h), index_map, pipeline_mode=pl.Buffered(depth)
            )
        except TypeError:
            pass
    return pl.BlockSpec((tile_rows, h), index_map)


def discriminator_forward(x, summary, weight):
    """x: (N, H), summary: (N, H), weight: (H, H) -> (N,). Matches torch forward."""
    n, h = x.shape
    assert summary.shape == (n, h)
    assert weight.shape == (h, h)

    in_itemsize = jnp.dtype(x.dtype).itemsize
    w_itemsize = jnp.dtype(weight.dtype).itemsize

    # Physical VMEM (v5e/v6e 128 MiB, v7x 64 MiB), with headroom for Mosaic's
    # own scratch; fall back conservatively if the query is unavailable.
    try:
        vmem_cap = int(pltpu.get_tpu_info().vmem_capacity_bytes)
    except Exception:  # pragma: no cover - defensive, e.g. older jax builds
        vmem_cap = 64 * 2**20
    vmem_budget = max(min(vmem_cap, 128 * 2**20) - 12 * 2**20, 16 * 2**20)

    in_buffers = 3  # budget for the 3-deep input pipeline (falls back to 2 safely)
    tile_rows, num_tiles, vmem_need = _pick_row_tile(
        n, h, in_itemsize, w_itemsize, in_buffers, vmem_budget
    )

    # Only deepen the input pipeline when there are enough grid steps for it
    # to matter.
    buffer_depth = 3 if num_tiles >= 4 else 2

    vmem_limit = int(min(max(vmem_need + 8 * 2**20, 32 * 2**20), vmem_cap - 4 * 2**20))

    cost = pl.CostEstimate(
        flops=int(2 * n * h * h + 3 * n * h),
        transcendentals=0,
        bytes_accessed=int(2 * n * h * in_itemsize + h * h * w_itemsize + n * 4),
    )

    out = pl.pallas_call(
        _discriminator_kernel,
        out_shape=jax.ShapeDtypeStruct((n, 1), jnp.float32),
        grid_spec=pltpu.PrefetchScalarGridSpec(
            num_scalar_prefetch=0,
            grid=(num_tiles,),
            in_specs=[
                _input_spec(tile_rows, h, buffer_depth),       # x row-block
                _input_spec(tile_rows, h, buffer_depth),       # summary row-block
                pl.BlockSpec((h, h), lambda i: (0, 0)),        # weight (grid-invariant)
            ],
            out_specs=pl.BlockSpec((tile_rows, 1), lambda i: (i, 0)),
        ),
        compiler_params=pltpu.CompilerParams(
            dimension_semantics=("parallel",),  # shard row blocks across TCs (v7x)
            vmem_limit_bytes=vmem_limit,
        ),
        cost_estimate=cost,
    )(x, summary, weight)

    # (N, 1) -> (N,), cast back to the input dtype (PyTorch returns x.dtype).
    return out[:, 0].astype(x.dtype)


def init_discriminator_weight(key, hidden_dim, dtype=jnp.float32):
    # Mirrors PyG's `uniform(size, tensor)`: U(-1/sqrt(size), 1/sqrt(size)).
    bound = 1.0 / math.sqrt(hidden_dim)
    return jax.random.uniform(
        key, (hidden_dim, hidden_dim), dtype=dtype, minval=-bound, maxval=bound
    )


def _reference(x, summary, weight):
    return jnp.sum(x * (summary @ weight), axis=1)


if __name__ == "__main__":
    fwd = jax.jit(discriminator_forward)

    # Canonical small shape implied by the module.
    key = jax.random.PRNGKey(0)
    k_w, k_x, k_s = jax.random.split(key, 3)
    hidden_dim, num_nodes = 32, 8
    weight = init_discriminator_weight(k_w, hidden_dim)
    x = jax.random.normal(k_x, (num_nodes, hidden_dim), dtype=jnp.float32)
    summary = jax.random.normal(k_s, (num_nodes, hidden_dim), dtype=jnp.float32)

    out = jax.block_until_ready(fwd(x, summary, weight))
    ref = _reference(x, summary, weight)
    assert out.shape == (num_nodes,)
    assert jnp.allclose(out, ref, atol=1e-5, rtol=1e-5), (out, ref)

    # Larger case exercising the multi-tile pipelined path with a partial
    # (over-covering) last row block — no wrapper-side padding involved.
    k_w2, k_x2, k_s2 = jax.random.split(jax.random.PRNGKey(1), 3)
    hidden_dim2, num_nodes2 = 64, 10007
    weight2 = init_discriminator_weight(k_w2, hidden_dim2)
    x2 = jax.random.normal(k_x2, (num_nodes2, hidden_dim2), dtype=jnp.float32)
    summary2 = jax.random.normal(k_s2, (num_nodes2, hidden_dim2), dtype=jnp.float32)

    out2 = jax.block_until_ready(fwd(x2, summary2, weight2))
    ref2 = _reference(x2, summary2, weight2)
    assert out2.shape == (num_nodes2,)
    assert jnp.allclose(out2, ref2, atol=1e-3, rtol=1e-3), float(
        jnp.max(jnp.abs(out2 - ref2))
    )

    print("KERNEL_OK")
</pallas_src>

<mosaic_0001>
module attributes {stable_mosaic.version = 11 : i64} {
  func.func @_discriminator_kernel(%arg0: i32, %arg1: memref<8x32xf32, #tpu.memory_space<vmem>>, %arg2: memref<8x32xf32, #tpu.memory_space<vmem>>, %arg3: memref<32x32xf32, #tpu.memory_space<vmem>>, %arg4: memref<8x1xf32, #tpu.memory_space<vmem>>) attributes {dimension_semantics = [#tpu.dimension_semantics<parallel>], iteration_bounds = array<i64: 1>, scalar_prefetch = 0 : i64, scratch_operands = 0 : i64, tpu.core_type = #tpu.core_type<tc>, window_params = [{transform_indices = @transform_0, window_bounds = array<i64: 8, 32>}, {transform_indices = @transform_1, window_bounds = array<i64: 8, 32>}, {pipeline_mode = #tpu.pipeline_mode<synchronous>, transform_indices = @transform_2, window_bounds = array<i64: 32, 32>}, {transform_indices = @transform_3, window_bounds = array<i64: 8, 1>}]} {
    %c0 = arith.constant 0 : index
    %c0_0 = arith.constant 0 : index
    %0 = vector.load %arg2[%c0, %c0_0] : memref<8x32xf32, #tpu.memory_space<vmem>>, vector<8x32xf32>
    %c0_1 = arith.constant 0 : index
    %c0_2 = arith.constant 0 : index
    %1 = vector.load %arg3[%c0_1, %c0_2] : memref<32x32xf32, #tpu.memory_space<vmem>>, vector<32x32xf32>
    %cst = arith.constant dense<0.000000e+00> : vector<8x32xf32>
    %2 = tpu.matmul %0, %1, %cst {dimension_numbers = #tpu.dot_dimension_numbers<[1], [0], [0], [1], [0, 0, 1, 1], [], []>} : vector<8x32xf32>, vector<32x32xf32>, vector<8x32xf32> -> vector<8x32xf32>
    %c0_3 = arith.constant 0 : index
    %c0_4 = arith.constant 0 : index
    %3 = vector.load %arg1[%c0_3, %c0_4] : memref<8x32xf32, #tpu.memory_space<vmem>>, vector<8x32xf32>
    %4 = arith.mulf %3, %2 : vector<8x32xf32>
    %cst_5 = arith.constant dense<0.000000e+00> : vector<8xf32>
    %5 = vector.multi_reduction <add>, %4, %cst_5 [1] : vector<8x32xf32> to vector<8xf32>
    %6 = vector.shape_cast %5 : vector<8xf32> to vector<8x1xf32>
    %c0_6 = arith.constant 0 : index
    %c0_7 = arith.constant 0 : index
    %7 = vector.load %arg4[%c0_6, %c0_7] : memref<8x1xf32, #tpu.memory_space<vmem>>, vector<8x1xf32>
    tpu.vector_store %arg4[%c0_6, %c0_7], %6 {strides = array<i32>} : memref<8x1xf32, #tpu.memory_space<vmem>>, vector<8x1xf32>,
    return
  }
  func.func @transform_0(%arg0: i32) -> (i32, i32) {
    %c0_i32 = arith.constant 0 : i32
    %c0_i32_0 = arith.constant 0 : i32
    return %arg0, %c0_i32 : i32, i32
  }
  func.func @transform_1(%arg0: i32) -> (i32, i32) {
    %c0_i32 = arith.constant 0 : i32
    %c0_i32_0 = arith.constant 0 : i32
    return %arg0, %c0_i32 : i32, i32
  }
  func.func @transform_2(%arg0: i32) -> (i32, i32) {
    %c0_i32 = arith.constant 0 : i32
    %c0_i32_0 = arith.constant 0 : i32
    %c0_i32_1 = arith.constant 0 : i32
    return %c0_i32, %c0_i32_0 : i32, i32
  }
  func.func @transform_3(%arg0: i32) -> (i32, i32) {
    %c0_i32 = arith.constant 0 : i32
    %c0_i32_0 = arith.constant 0 : i32
    return %arg0, %c0_i32 : i32, i32
  }
}

</mosaic_0001>

<llo_original>
// kernel: discriminator_forward.1
$region0: #{discriminator_forward.1}
  #allocation0 [shape = 'u32[]', space=smem, size = 0x4, offset = 0x4, fixed_abs, tag = 'smem constant byte address 0x4 - core index']
  #allocation1 [shape = 'u32[144,128]{1,0:T(1,128)}', space=vmem, size = 0x12000, scoped, tag = 'internal scratch']
  %s0 = inlined_call_operand.hbm [shape: f32[8,32], index: 0, kind: input, shape index: {}]
  %s1 = inlined_call_operand.hbm [shape: f32[8,32], index: 1, kind: input, shape index: {}]
  %s2 = inlined_call_operand.hbm [shape: f32[32,32], index: 2, kind: input, shape index: {}]
  %s3 = inlined_call_operand.vmem [shape: f32[8,1], index: 3, kind: output, shape index: {}]
  %s4 = sld [smem:[#allocation0]]
  $region34: #{discriminator_forward.1} parent=0
    _
  %s6 = ssub.s32 1, %s4
  %s7 = scalar_select 0, %s6, %s4
  $region1: #{discriminator_forward.1} parent=0
    #allocation2 [shape = 'u8[4096]{0}', space=vmem, size = 0x1000, scoped, tag = 'input window, operand 0, single buffered']
    #allocation3 [shape = 's32[1]{0}', space=sflag, size = 0x4, scoped, tag = 'scoped memory for discriminator_forward.1']
    #allocation4 [shape = 'u8[4096]{0}', space=vmem, size = 0x1000, scoped, tag = 'input window, operand 1, single buffered']
    #allocation5 [shape = 's32[1]{0}', space=sflag, size = 0x4, scoped, tag = 'scoped memory for discriminator_forward.1']
    #allocation6 [shape = 'u8[16384]{0}', space=vmem, size = 0x4000, scoped, tag = 'input window, operand 2, single buffered']
    %8 = vsyncpa [#allocation3], 0
    %9 = vsyncpa [#allocation5], 0
    // Predicated region
    $region2: #{discriminator_forward.1} parent=1 // pred_check
      _
    $region3: #{discriminator_forward.1} parent=1 // pred_check_branch
      %11 = sbr.rel (0) target = $region5
    $region4: #{discriminator_forward.1} parent=1 // pred_region
      %s13 = ssub.s32 128, 128
      %14 = vsyncadd [#allocation3], %s13
      %s16 = sshll.u32 [#allocation2], 4
      %s17 = int_to_ptr.vmem [resolvable:$true] %s16
      %19 = dma.hbm_to_vmem [thread:$0]  %s0, 128, %s17, [#allocation3]
    $region5: #{discriminator_forward.1} parent=1 // pred_fallthru
      _
    // Predicated region
    $region6: #{discriminator_forward.1} parent=1 // pred_check
      _
    $region7: #{discriminator_forward.1} parent=1 // pred_check_branch
      %21 = sbr.rel (0) target = $region9
    $region8: #{discriminator_forward.1} parent=1 // pred_region
      %s23 = ssub.s32 128, 128
      %24 = vsyncadd [#allocation5], %s23
      %s26 = sshll.u32 [#allocation4], 4
      %s27 = int_to_ptr.vmem [resolvable:$true] %s26
      %29 = dma.hbm_to_vmem [thread:$0]  %s1, 128, %s27, [#allocation5]
    $region9: #{discriminator_forward.1} parent=1 // pred_fallthru
      _
    // Predicated region
    $region10: #{discriminator_forward.1} parent=1 // pred_check
      _
    $region11: #{discriminator_forward.1} parent=1 // pred_check_branch
      %31 = sbr.rel (0) target = $region13
    $region12: #{discriminator_forward.1} parent=1 // pred_region
      %s33 = ssub.s32 512, 512
      %34 = vsyncadd [#allocation5], %s33
      %s35 = sshll.u32 [#allocation6], 4
      %s36 = int_to_ptr.vmem [resolvable:$true] %s35
      %41 = dma.hbm_to_vmem [thread:$0]  %s2, 512, %s36, [#allocation5], 128, 128, 8
    $region13: #{discriminator_forward.1} parent=1 // pred_fallthru
      _
    // Predicated region
    $region14: #{discriminator_forward.1} parent=1 // pred_check
      _
    $region15: #{discriminator_forward.1} parent=1 // pred_check_branch
      %43 = sbr.rel (0) target = $region17
    $region16: #{discriminator_forward.1} parent=1 // pred_region
      %44 = dma.done [#allocation3], 128
    $region17: #{discriminator_forward.1} parent=1 // pred_fallthru
      _
    // Predicated region
    $region18: #{discriminator_forward.1} parent=1 // pred_check
      _
    $region19: #{discriminator_forward.1} parent=1 // pred_check_branch
      %46 = sbr.rel (0) target = $region21
    $region20: #{discriminator_forward.1} parent=1 // pred_region
      %47 = dma.done [#allocation5], 128
    $region21: #{discriminator_forward.1} parent=1 // pred_fallthru
      _
    // Predicated region
    $region22: #{discriminator_forward.1} parent=1 // pred_check
      _
    $region23: #{discriminator_forward.1} parent=1 // pred_check_branch
      %49 = sbr.rel (0) target = $region25
    $region24: #{discriminator_forward.1} parent=1 // pred_region
      %50 = dma.done [#allocation5], 512
    $region25: #{discriminator_forward.1} parent=1 // pred_fallthru
      _
    %v51 = vld [vmem:[#allocation4] sm:$0xff]
    %v52 = vld [vmem:[#allocation6] sm:$0xff]
    %v53 = vld [vmem:[#allocation6 + $0x8] sm:$0xff]
    %v54 = vld [vmem:[#allocation6 + $0x10] sm:$0xff]
    %v55 = vld [vmem:[#allocation6 + $0x18] sm:$0xff]
    %vm56 = vcmask 261120
    %v58 = vsel %vm56, %v51, 0
    %60 = vmatprep.subr.mxu0 0.0
    %61 = vmatpush1.msra.mxu0 %v52
    %62 = vmatprep.subr.mxu0 0.0
    %63 = vmatpush1.msra.mxu0 %v53
    %64 = vmatprep.subr.mxu0 0.0
    %65 = vmatpush1.msra.mxu0 %v54
    %66 = vmatprep.subr.mxu0 0.0
    %67 = vmatpush1.msra.mxu0 %v55
    %68 = vmatprep.subr.mxu0 0.0
    %69 = vmatpush1.msra.mxu0 0.0
    %70 = vmatprep.subr.mxu0 0.0
    %71 = vmatpush1.msra.mxu0 0.0
    %72 = vmatprep.subr.mxu0 0.0
    %73 = vmatpush1.msra.mxu0 0.0
    %74 = vmatprep.subr.mxu0 0.0
    %75 = vmatpush1.msra.mxu0 0.0
    %76 = vmatprep.subr.mxu0 0.0
    %77 = vmatpush1.msra.mxu0 0.0
    %78 = vmatprep.subr.mxu0 0.0
    %79 = vmatpush1.msra.mxu0 0.0
    %80 = vmatprep.subr.mxu0 0.0
    %81 = vmatpush1.msra.mxu0 0.0
    %82 = vmatprep.subr.mxu0 0.0
    %83 = vmatpush1.msra.mxu0 0.0
    %84 = vmatprep.subr.mxu0 0.0
    %85 = vmatpush1.msra.mxu0 0.0
    %86 = vmatprep.subr.mxu0 0.0
    %87 = vmatpush1.msra.mxu0 0.0
    %88 = vmatprep.subr.mxu0 0.0
    %89 = vmatpush1.msra.mxu0 0.0
    %90 = vmatprep.subr.mxu0 0.0
    %91 = vmatpush1.msra.mxu0 0.0
    %92 = vmatprep.subr.mxu0 0.0
    %93 = vmatpush1.msra.mxu0 0.0
    %94 = vmatprep.subr.mxu0 0.0
    %95 = vmatpush1.msra.mxu0 0.0
    %96 = vmatprep.subr.mxu0 0.0
    %97 = vmatpush1.msra.mxu0 0.0
    %98 = vmatprep.subr.mxu0 0.0
    %99 = vmatpush1.msra.mxu0 0.0
    %100 = vmatprep.subr.mxu0 0.0
    %101 = vmatpush1.msra.mxu0 0.0
    %102 = vmatprep.subr.mxu0 0.0
    %103 = vmatpush1.msra.mxu0 0.0
    %104 = vmatprep.subr.mxu0 0.0
    %105 = vmatpush1.msra.mxu0 0.0
    %106 = vmatprep.subr.mxu0 0.0
    %107 = vmatpush1.msra.mxu0 0.0
    %108 = vmatprep.subr.mxu0 0.0
    %109 = vmatpush1.msra.mxu0 0.0
    %110 = vmatprep.subr.mxu0 0.0
    %111 = vmatpush1.msra.mxu0 0.0
    %112 = vmatprep.subr.mxu0 0.0
    %113 = vmatpush1.msra.mxu0 0.0
    %114 = vmatprep.subr.mxu0 0.0
    %115 = vmatpush1.msra.mxu0 0.0
    %116 = vmatprep.subr.mxu0 0.0
    %117 = vmatpush1.msra.mxu0 0.0
    %118 = vmatprep.subr.mxu0 0.0
    %119 = vmatpush1.msra.mxu0 0.0
    %120 = vmatprep.subr.mxu0 0.0
    %121 = vmatpush1.msra.mxu0 0.0
    %122 = vmatprep.subr.mxu0 0.0
    %123 = vmatpush1.msra.mxu0 0.0
    %124 = vmatprep.mubr.f32.mxu0 0.0
    %125 = vmatmul.mubr.f32.gmra.mrb[0].mxu0 %v58
    %v126 = vpop.f32.mrb[0].mxu0
    %v127 = vadd.f32 0.0, %v126
    %v128 = vpop.f32.mrb[0].mxu0
    %129 = vdwg.mxu0
    %v130 = vld [vmem:[#allocation2] sm:$0xff]
    %v131 = vmul.f32 %v130, %v127
    %v132 = vsel %vm56, %v131, 0.0
    %133 = vadd.xlane.f32.xlu0 %v132
    %v134 = vpop.xlane.xlu0 %133
    %vm135 = vcmask 7168
    %136 = vst.msk [vmem:[%s3] sm:$0xff] %vm135, %v134
    // Predicated region
    $region26: #{discriminator_forward.1} parent=1 // pred_check
      _
    $region27: #{discriminator_forward.1} parent=1 // pred_check_branch
      %138 = sbr.rel (0) target = $region29
    $region28: #{discriminator_forward.1} parent=1 // pred_region
      _
    $region29: #{discriminator_forward.1} parent=1 // pred_fallthru
      _
    // Predicated region
    $region30: #{discriminator_forward.1} parent=1 // pred_check
      _
    $region31: #{discriminator_forward.1} parent=1 // pred_check_branch
      %140 = sbr.rel (0) target = $region33
    $region32: #{discriminator_forward.1} parent=1 // pred_region
      _
    $region33: #{discriminator_forward.1} parent=1 // pred_fallthru
      _
    %141 = vsyncpa [#allocation3], 1
    %142 = vsyncpa [#allocation5], 1

</llo_original>
